<compile_context>
chip_gen: v6e
topology: v6e:2x2x1
jax: 0.10.0
libtpu: 0.0.40
codegen_flags: <defaults>
</compile_context>

<pallas_src>
import math
import functools
import numpy as np

import jax
import jax.numpy as jnp
from jax import lax
from jax.experimental import pallas as pl
from jax.experimental.pallas import tpu as pltpu


_VMEM_LIMIT = 32 * 1024 * 1024   # safe scoped-VMEM cap on v5e / v6e / v7x


def _tile(n, cap, quantum):
    """Largest divisor of n that is <= cap and a multiple of quantum (else n)."""
    if n <= cap:
        return n
    for d in range(cap, 0, -1):
        if n % d == 0 and d % quantum == 0:
            return d
    return n


# ----------------------------- Pallas kernels ------------------------------

def _upsample_kernel(uh_ref, xp_ref, uwc_ref, o_ref):
    # Separable bilinear-x2 upsample (+crop) as two small matmuls.
    #   uh_ref : [TH, Hp]        row-stencil rows for this output-row tile
    #   xp_ref : [1, Hp, Wp*C]   CircPad(1)-padded input, (width, channel) flattened
    #   uwc_ref: [Wp*C, W2*C]    kron(U_w^T, I_C)  (channel-interleaved col stencil)
    #   o_ref  : [1, TH, W2*C]   lane-dense output (last dim = W2*C)
    t = jnp.dot(uh_ref[...], xp_ref[0], preferred_element_type=jnp.float32)
    o_ref[0] = jnp.dot(t, uwc_ref[...], preferred_element_type=jnp.float32)


def _of_kernel(xp_ref, w1_ref, b1_ref, w2_ref, b2_ref, xy_ref, o_ref):
    # xp_ref: [1, H+2, W+2, Cg]  CircPad(1)-padded of-net input (one batch)
    # w1_ref: [9*Cg, Cmid]       3x3 conv taps packed tap-major (single K=9*Cg matmul)
    # b1_ref: [1, Cmid]   w2_ref: [Cmid, 2]   b2_ref: [1, 2]
    # xy_ref: [N, 2]             base pixel grid (x, y), N = H*W
    # o_ref : [1, N, 2]          absolute sampling coordinates (x, y)
    # NOTE: output last dim is 2 (tiny, 8 KB/batch) -> masked stores are acceptable here.
    _, Hp, Wp, Cg = xp_ref.shape
    H, W = Hp - 2, Wp - 2

    xp = xp_ref[0]                                     # [Hp, Wp, Cg]
    cols = []
    for dy in range(3):                                # im2col: 9 shifted slices -> one matmul
        for dx in range(3):
            cols.append(xp[dy:dy + H, dx:dx + W, :].reshape(H * W, Cg))
    patches = jnp.concatenate(cols, axis=-1)           # [N, 9*Cg]

    h = jnp.dot(patches, w1_ref[...], preferred_element_type=jnp.float32) + b1_ref[...]
    # exact GELU (erf), matching torch.nn.GELU() default
    h = 0.5 * h * (1.0 + lax.erf(h * (1.0 / math.sqrt(2.0))))
    of = jnp.dot(h, w2_ref[...], preferred_element_type=jnp.float32) + b2_ref[...]
    o_ref[0] = of + xy_ref[...]


def _sample_kernel(x_ref, c_ref, bc_ref, o_ref, *, H, Cout):
    # Spherical bilinear grid_sample (align_corners=True, wrap column) fused with
    # the final 1x1 conv (pre-multiplied into the source).
    #   x_ref : [1, Cout*H, W]   source image already multiplied by wc, channels-first
    #   c_ref : [1, 2, TN]       query coords (row 0 = gh, row 1 = gw), already "reminded"
    #   bc_ref: [Cout, 1]        final conv bias
    #   o_ref : [1, Cout, TN]    lane-dense output (TN is a multiple of 128 or = N)
    _, CH, W = x_ref.shape
    TN = c_ref.shape[2]
    We = W + 1                                          # width incl. wrap column

    gh = c_ref[0, 0:1, :]                               # [1, TN]  (f32, kept exact)
    gw = c_ref[0, 1:2, :]

    h0 = jnp.floor(gh)
    fh = gh - h0
    h1 = jnp.minimum(h0 + 1.0, float(H - 1))            # clamped corner has weight fh == 0
    w0 = jnp.floor(gw)
    fw = gw - w0
    w1 = jnp.minimum(w0 + 1.0, float(We - 1))           # clamped corner has weight fw == 0

    # separable one-hot bilinear weights (never materialize an [N, S] matrix)
    ih = lax.broadcasted_iota(jnp.int32, (H, TN), 0)
    roww = ((ih == h0.astype(jnp.int32)).astype(jnp.float32) * (1.0 - fh)
            + (ih == h1.astype(jnp.int32)).astype(jnp.float32) * fh)       # [H, TN]

    iw = lax.broadcasted_iota(jnp.int32, (We, TN), 0)
    colw_e = ((iw == w0.astype(jnp.int32)).astype(jnp.float32) * (1.0 - fw)
              + (iw == w1.astype(jnp.int32)).astype(jnp.float32) * fw)     # [We, TN]
    # column W of the wrap-extended image equals column 0, so fold its weight onto
    # column 0 instead of materializing the wrap column.
    colw = jnp.concatenate([colw_e[0:1, :] + colw_e[W:W + 1, :],
                            colw_e[1:W, :]], axis=0)                        # [W, TN]

    # stage A: contract width on the MXU, result lane-dense on TN
    z = jnp.dot(x_ref[0], colw, preferred_element_type=jnp.float32)         # [Cout*H, TN]
    z = z.reshape(Cout, H, TN)
    # stage B: per-query weighted reduce over rows (2 taps per query)
    y = jnp.sum(z * roww[None, :, :], axis=1)                               # [Cout, TN]
    o_ref[0] = y + bc_ref[...]


# --------------------------- pallas_call wrappers ---------------------------

def _pcall_upsample(uh, xp2, uwc):
    B, Hp, WpC = xp2.shape
    H2 = uh.shape[0]
    W2C = uwc.shape[1]
    TH = _tile(H2, 512, 8)
    return pl.pallas_call(
        _upsample_kernel,
        out_shape=jax.ShapeDtypeStruct((B, H2, W2C), jnp.float32),
        grid_spec=pltpu.PrefetchScalarGridSpec(
            num_scalar_prefetch=0, grid=(B, H2 // TH),
            in_specs=[pl.BlockSpec((TH, Hp), lambda b, i: (i, 0)),
                      pl.BlockSpec((1, Hp, WpC), lambda b, i: (b, 0, 0)),
                      pl.BlockSpec(uwc.shape, lambda b, i: (0, 0))],
            out_specs=pl.BlockSpec((1, TH, W2C), lambda b, i: (b, i, 0))),
        compiler_params=pltpu.CompilerParams(
            dimension_semantics=("parallel", "parallel"),
            vmem_limit_bytes=_VMEM_LIMIT),
    )(uh, xp2, uwc)


def _pcall_of(xp, w1r, b1, w2, b2, xy):
    # TODO(synk): at very large resolutions this kernel needs halo row-tiling via
    #             manual DMA (overlapping windows); whole-image blocks are fine here.
    B, Hp, Wp, Cg = xp.shape
    H, W = Hp - 2, Wp - 2
    N = H * W
    return pl.pallas_call(
        _of_kernel,
        out_shape=jax.ShapeDtypeStruct((B, N, 2), jnp.float32),
        grid_spec=pltpu.PrefetchScalarGridSpec(
            num_scalar_prefetch=0, grid=(B,),
            in_specs=[pl.BlockSpec((1, Hp, Wp, Cg), lambda b: (b, 0, 0, 0)),
                      pl.BlockSpec(w1r.shape, lambda b: (0, 0)),
                      pl.BlockSpec(b1.shape, lambda b: (0, 0)),
                      pl.BlockSpec(w2.shape, lambda b: (0, 0)),
                      pl.BlockSpec(b2.shape, lambda b: (0, 0)),
                      pl.BlockSpec(xy.shape, lambda b: (0, 0))],
            out_specs=pl.BlockSpec((1, N, 2), lambda b: (b, 0, 0))),
        compiler_params=pltpu.CompilerParams(
            dimension_semantics=("parallel",),
            vmem_limit_bytes=_VMEM_LIMIT),
    )(xp, w1r, b1, w2, b2, xy)


def _pcall_sample(xwc2, coords, bc2, H, W, Cout):
    B = xwc2.shape[0]
    N = coords.shape[2]
    TN = _tile(N, 4096, 128)
    kern = functools.partial(_sample_kernel, H=H, Cout=Cout)
    return pl.pallas_call(
        kern,
        out_shape=jax.ShapeDtypeStruct((B, Cout, N), jnp.float32),
        grid_spec=pltpu.PrefetchScalarGridSpec(
            num_scalar_prefetch=0, grid=(B, N // TN),
            in_specs=[pl.BlockSpec((1, Cout * H, W), lambda b, n: (b, 0, 0)),
                      pl.BlockSpec((1, 2, TN), lambda b, n: (b, 0, n)),
                      pl.BlockSpec((Cout, 1), lambda b, n: (0, 0))],
            out_specs=pl.BlockSpec((1, Cout, TN), lambda b, n: (b, 0, n))),
        compiler_params=pltpu.CompilerParams(
            dimension_semantics=("parallel", "parallel"),
            vmem_limit_bytes=_VMEM_LIMIT),
    )(xwc2, coords, bc2)


# -------------------------------- JAX glue ----------------------------------

def circ_pad1_nhwc(x):
    """CircPad(1): spherical pad (flip + roll W//2 vertically, circular in W)."""
    B, H, W, C = x.shape
    assert H % 2 == 0 and W % 2 == 0
    up = jnp.roll(x[:, :1], W // 2, axis=2)       # flip of a 1-row slice is identity
    down = jnp.roll(x[:, -1:], W // 2, axis=2)
    x2 = jnp.concatenate([up, x, down], axis=1)
    x2 = jnp.concatenate([x2[:, :, -1:], x2, x2[:, :, :1]], axis=2)  # circular W pad
    return x2


def _upsample_matrix(n):
    """1-D stencil for (bilinear x2, align_corners=False) on length n+2 followed by
    cropping 2 pixels per side -> [2n, n+2]. All source coords are interior."""
    U = np.zeros((2 * n, n + 2), dtype=np.float32)
    for k in range(n):
        U[2 * k, k] = 0.25
        U[2 * k, k + 1] = 0.75
        U[2 * k + 1, k + 1] = 0.75
        U[2 * k + 1, k + 2] = 0.25
    return U


def geo_grid_nhwc(h, w):
    # TODO(synk): uv_grid not provided in the source; assume equirectangular
    # (v = latitude, u = longitude, half-pixel centers).
    v = (jnp.arange(h, dtype=jnp.float32) + 0.5) / h * jnp.pi - jnp.pi / 2
    u = (jnp.arange(w, dtype=jnp.float32) + 0.5) / w * (2.0 * jnp.pi) - jnp.pi
    vg = jnp.broadcast_to(v[:, None], (h, w))
    ug = jnp.broadcast_to(u[None, :], (h, w))
    return jnp.stack([jnp.sin(vg), jnp.cos(vg), jnp.sin(ug), jnp.cos(ug),
                      jnp.cos(vg) * jnp.cos(ug)], axis=-1)        # [h, w, 5] ('geo')


def xy_grid_nhwc(h, w):
    # TODO(synk): xy_grid not provided; assume pixel grid, channel 0 = x, 1 = y.
    ys = jnp.broadcast_to(jnp.arange(h, dtype=jnp.float32)[:, None], (h, w))
    xs = jnp.broadcast_to(jnp.arange(w, dtype=jnp.float32)[None, :], (h, w))
    return jnp.stack([xs, ys], axis=-1)                           # [h, w, 2]


def spherical_reminder(gh, gw, h, w):
    """Data-dependent while loop kept in plain JAX (lax.while_loop). f32 throughout."""
    gh = jnp.where(jnp.isinf(gh) | jnp.isnan(gh), 0.0, gh)
    gw = jnp.where(jnp.isinf(gw) | jnp.isnan(gw), 0.0, gw)
    hf, wf = float(h), float(w)

    def cond(s):
        a, b = s
        return (a.min() < 0) | (a.max() > hf - 1) | (b.min() < 0) | (b.max() > wf)

    def body(s):
        a, b = s
        over = a < 0
        a = jnp.where(over, -a, a)
        b = jnp.where(over, b + (w // 2), b)
        under = a > hf - 1
        a = jnp.where(under, 2.0 * (hf - 1) - a, a)
        b = jnp.where(under, b + (w // 2), b)
        b = jnp.remainder(b, wf)
        return a, b

    return lax.while_loop(cond, body, (gh, gw))


def ofrs_forward(x_nchw, params, scale=2):
    assert scale == 2
    B, C, H, W = x_nchw.shape
    x = jnp.transpose(x_nchw, (0, 2, 3, 1)).astype(jnp.float32)   # NHWC

    # 1) CircPad(1)
    xp = circ_pad1_nhwc(x)                                        # [B, H+2, W+2, C]
    H2, W2 = 2 * H, 2 * W

    # 2) separable bilinear x2 upsample + crop [2:-2]  (Pallas kernel 1)
    #    NOTE: kron(U_w^T, I_C) is only O(W^2*C^2) — tiny for small C — not the
    #    full O((HW)^2) kron of the previous version.
    uh = jnp.asarray(_upsample_matrix(H))                         # [2H, H+2]
    uwc = jnp.asarray(np.kron(_upsample_matrix(W).T,
                              np.eye(C, dtype=np.float32)))       # [(W+2)C, 2W*C]
    xp2 = xp.reshape(B, H + 2, (W + 2) * C)                       # free reshape
    xu = _pcall_upsample(uh, xp2, uwc).reshape(B, H2, W2, C)      # [B, H2, W2, C]

    # 3) of-net input: concat 'geo' embedding, CircPad(1)
    geo = jnp.broadcast_to(geo_grid_nhwc(H2, W2)[None], (B, H2, W2, 5))
    of_in_p = circ_pad1_nhwc(jnp.concatenate([xu, geo], axis=-1)) # [B, H2+2, W2+2, C+5]

    # 4) of-net + xy_grid  (Pallas kernel 2) -> absolute sampling coords (x, y)
    Cg = C + 5
    Cmid = params["w1"].shape[-1]
    w1r = params["w1"].reshape(9 * Cg, Cmid)                      # tap-major, channel-minor
    N = H2 * W2
    xy = xy_grid_nhwc(H2, W2).reshape(N, 2)
    grid_of = _pcall_of(of_in_p, w1r, params["b1"],
                        params["w2"], params["b2"], xy)           # [B, N, 2]

    # 5) spherical reminder (indexing='xy': ch0 = w/x, ch1 = h/y)
    gh_r, gw_r = spherical_reminder(grid_of[..., 1], grid_of[..., 0], H2, W2)
    coords = jnp.stack([gh_r, gw_r], axis=1)                      # [B, 2, N]  (f32)

    # 6) bilinear grid sample + final 1x1 conv (Pallas kernel 3).
    #    The 1x1 conv weight is pre-multiplied into the source (exact by linearity);
    #    this also produces the channels-first layout the kernel wants.
    Cout = params["wc"].shape[-1]
    xwc2 = jnp.einsum("bhwc,cd->bdhw", xu, params["wc"]).reshape(B, Cout * H2, W2)
    bc2 = params["bc"].reshape(Cout, 1)
    y = _pcall_sample(xwc2, coords, bc2, H2, W2, Cout)            # [B, Cout, N]

    return y.reshape(B, Cout, H2, W2)                             # NCHW (free reshape)


def init_params(key, in_channels, out_channels, mid_channels=32, grid_channels=5):
    ks = jax.random.split(key, 6)
    cg = in_channels + grid_channels
    return dict(
        w1=jax.random.normal(ks[0], (9, cg, mid_channels), jnp.float32) * 0.05,
        b1=jax.random.normal(ks[1], (1, mid_channels), jnp.float32) * 0.05,
        w2=jax.random.normal(ks[2], (mid_channels, 2), jnp.float32) * 0.05,
        b2=jax.random.normal(ks[3], (1, 2), jnp.float32) * 0.05,
        wc=jax.random.normal(ks[4], (in_channels, out_channels), jnp.float32) * 0.1,
        bc=jax.random.normal(ks[5], (1, out_channels), jnp.float32) * 0.1,
    )


if __name__ == "__main__":
    key = jax.random.PRNGKey(0)
    kx, kp = jax.random.split(key)

    B, C, H, W = 2, 4, 16, 16                     # in_channels=4 -> out_channels=2
    x = jax.random.normal(kx, (B, C, H, W), jnp.float32)
    params = init_params(kp, in_channels=C, out_channels=C // 2)

    out = ofrs_forward(x, params, scale=2)
    out = jax.block_until_ready(out)
    assert out.shape == (B, C // 2, 2 * H, 2 * W), out.shape
    assert bool(jnp.all(jnp.isfinite(out)))
    print("KERNEL_OK")
</pallas_src>

<mosaic_0001>
module attributes {stable_mosaic.version = 11 : i64} {
  func.func @_upsample_kernel(%arg0: i32, %arg1: i32, %arg2: memref<32x18xf32, #tpu.memory_space<vmem>>, %arg3: memref<1x18x72xf32, #tpu.memory_space<vmem>>, %arg4: memref<72x128xf32, #tpu.memory_space<vmem>>, %arg5: memref<1x32x128xf32, #tpu.memory_space<vmem>>) attributes {dimension_semantics = [#tpu.dimension_semantics<parallel>, #tpu.dimension_semantics<parallel>], iteration_bounds = array<i64: 2, 1>, scalar_prefetch = 0 : i64, scratch_operands = 0 : i64, tpu.core_type = #tpu.core_type<tc>, window_params = [{transform_indices = @transform_0, window_bounds = array<i64: 32, 18>}, {transform_indices = @transform_1, window_bounds = array<i64: 1, 18, 72>}, {pipeline_mode = #tpu.pipeline_mode<synchronous>, transform_indices = @transform_2, window_bounds = array<i64: 72, 128>}, {transform_indices = @transform_3, window_bounds = array<i64: 1, 32, 128>}]} {
    %c0 = arith.constant 0 : index
    %c0_0 = arith.constant 0 : index
    %0 = vector.load %arg2[%c0, %c0_0] : memref<32x18xf32, #tpu.memory_space<vmem>>, vector<32x18xf32>
    %c0_1 = arith.constant 0 : index
    %c0_2 = arith.constant 0 : index
    %c0_3 = arith.constant 0 : index
    %1 = vector.load %arg3[%c0_1, %c0_2, %c0_3] : memref<1x18x72xf32, #tpu.memory_space<vmem>>, vector<1x18x72xf32>
    %2 = vector.shape_cast %1 : vector<1x18x72xf32> to vector<18x72xf32>
    %cst = arith.constant dense<0.000000e+00> : vector<32x72xf32>
    %3 = tpu.matmul %0, %2, %cst {dimension_numbers = #tpu.dot_dimension_numbers<[1], [0], [0], [1], [0, 0, 1, 1], [], []>} : vector<32x18xf32>, vector<18x72xf32>, vector<32x72xf32> -> vector<32x72xf32>
    %c0_4 = arith.constant 0 : index
    %c0_5 = arith.constant 0 : index
    %4 = vector.load %arg4[%c0_4, %c0_5] : memref<72x128xf32, #tpu.memory_space<vmem>>, vector<72x128xf32>
    %cst_6 = arith.constant dense<0.000000e+00> : vector<32x128xf32>
    %5 = tpu.matmul %3, %4, %cst_6 {dimension_numbers = #tpu.dot_dimension_numbers<[1], [0], [0], [1], [0, 0, 1, 1], [], []>} : vector<32x72xf32>, vector<72x128xf32>, vector<32x128xf32> -> vector<32x128xf32>
    %c0_7 = arith.constant 0 : index
    %c0_8 = arith.constant 0 : index
    %c0_9 = arith.constant 0 : index
    %6 = vector.load %arg5[%c0_7, %c0_8, %c0_9] : memref<1x32x128xf32, #tpu.memory_space<vmem>>, vector<1x32x128xf32>
    %7 = vector.shape_cast %6 : vector<1x32x128xf32> to vector<32x128xf32>
    %8 = vector.shape_cast %5 : vector<32x128xf32> to vector<1x32x128xf32>
    tpu.vector_store %arg5[%c0_7, %c0_8, %c0_9], %8 {strides = array<i32>} : memref<1x32x128xf32, #tpu.memory_space<vmem>>, vector<1x32x128xf32>,
    return
  }
  func.func @transform_0(%arg0: i32, %arg1: i32) -> (i32, i32) {
    %c0_i32 = arith.constant 0 : i32
    %c0_i32_0 = arith.constant 0 : i32
    return %arg1, %c0_i32 : i32, i32
  }
  func.func @transform_1(%arg0: i32, %arg1: i32) -> (i32, i32, i32) {
    %c0_i32 = arith.constant 0 : i32
    %c0_i32_0 = arith.constant 0 : i32
    %c0_i32_1 = arith.constant 0 : i32
    return %arg0, %c0_i32, %c0_i32_0 : i32, i32, i32
  }
  func.func @transform_2(%arg0: i32, %arg1: i32) -> (i32, i32) {
    %c0_i32 = arith.constant 0 : i32
    %c0_i32_0 = arith.constant 0 : i32
    %c0_i32_1 = arith.constant 0 : i32
    return %c0_i32, %c0_i32_0 : i32, i32
  }
  func.func @transform_3(%arg0: i32, %arg1: i32) -> (i32, i32, i32) {
    %c0_i32 = arith.constant 0 : i32
    %c0_i32_0 = arith.constant 0 : i32
    return %arg0, %arg1, %c0_i32 : i32, i32, i32
  }
}

</mosaic_0001>

<llo_original>
// kernel: tpu_custom_call.1
$region0: #{tpu_custom_call.1}
  #allocation0 [shape = 'u32[]', space=smem, size = 0x4, offset = 0x4, fixed_abs, tag = 'smem constant byte address 0x4 - core index']
  #allocation1 [shape = 'u32[144,128]{1,0:T(1,128)}', space=vmem, size = 0x12000, scoped, tag = 'internal scratch']
  %s0 = inlined_call_operand.vmem [shape: f32[32,18], index: 0, kind: input, shape index: {}]
  %s1 = inlined_call_operand.vmem [shape: f32[2,18,72], index: 1, kind: input, shape index: {}]
  %s2 = inlined_call_operand.vmem [shape: f32[72,128], index: 2, kind: input, shape index: {}]
  %s3 = inlined_call_operand.hbm [shape: f32[2,32,128], index: 3, kind: output, shape index: {}]
  %s4 = sld [smem:[#allocation0]]
  $region45: #{tpu_custom_call.1} parent=0
    _
  %s6 = ssub.s32 1, %s4
  %s7 = scalar_select 0, %s6, %s4
  $region1: #{tpu_custom_call.1} parent=0
    #allocation2 [shape = 'u8[32768]{0}', space=vmem, size = 0x8000, scoped, tag = 'output window, operand 0']
    #allocation3 [shape = 's32[2]{0}', space=sflag, size = 0x8, scoped, tag = 'scoped memory for tpu_custom_call.1']
    %8 = vsyncpa [#allocation3], 0
    %s9 = scalar_lea.sflag [#allocation3], 1
    %10 = vsyncpa %s9, 0
    loop: start=0, step=1, limit=4
    $region2: #{tpu_custom_call.1} parent=1 // loop_pre_header
      _
    $region3: #{tpu_custom_call.1} parent=1 // loop_header
      %s12 = sphi 0, %s16
      %p13 = scmp.ge.s32.totalorder %s12, 4
      %s19 = sphi 0, %s31
      %s20 = sphi 0, %s27
      %s21 = sphi 0, %s19
      %s22 = sphi 0, %s20
      %s23 = sphi 0, %s21
      %s24 = sphi 0, %s22
      %s34 = sphi 0, %s36
      %s37 = sphi 0, %s34
      %s38 = sphi 0, %s37
      %s54 = sphi 0, %s38
      %s60 = sphi 0, %s62
      %s63 = sphi 0, %s60
      %s64 = sphi 0, %s63
      %s80 = sphi 0, %s64
      %s84 = sphi 0, %s84
      %s86 = sphi 0, %s84
      %s87 = sphi 0, %s86
      %s101 = sphi 0, %s87
      %s109 = sphi 0, %s111
      %s112 = sphi 0, %s109
      %s113 = sphi 0, %s112
      %s129 = sphi 0, %s113
    $region4: #{tpu_custom_call.1} parent=1 // loop_header_branch
      %15 = sbr.rel (%p13) target = $region8
    $region5: #{tpu_custom_call.1} parent=1 // loop_body
      %s17 = ssub.s32 %s12, 1
      %s18 = ssub.s32 %s12, 2
      %s25 = sadd.s32 1, %s20
      %p26 = scmp.ge.s32.totalorder %s25, 1
      %s27 = scalar_select %p26, 0, %s25
      %s28 = sadd.s32 1, %s19
      %s29 = scalar_select %p26, %s28, %s19
      %p30 = scmp.ge.s32.totalorder %s29, 2
      %s31 = scalar_select %p30, 0, %s29
      %s32 = ssub.s32 %s20, %s27
      %p33 = scmp.eq.s32.totalorder %s32, 0
      %s35 = sadd.s32 %s34, 1
      %s36 = scalar_select %p33, %s34, %s35
      %p39 = pneg %p33
      %p40 = scmp.eq.s32.totalorder %s12, 1
      %p41 = por %p39, %p40
      %p42 = scmp.ne.s32.totalorder %s34, %s37
      %p43 = scmp.eq.s32.totalorder %s12, 0
      %p44 = por %p42, %p43
      %p45 = scmp.ne.s32.totalorder %s34, %s37
      %p46 = scmp.eq.s32.totalorder %s17, 1
      %p47 = por %p45, %p46
      %p48 = scmp.ne.s32.totalorder %s37, %s38
      %p49 = scmp.eq.s32.totalorder %s17, 0
      %p50 = por %p48, %p49
      %p51 = scmp.ne.s32.totalorder %s37, %s38
      %p52 = scmp.eq.s32.totalorder %s18, 1
      %p53 = por %p51, %p52
      %p55 = scmp.ne.s32.totalorder %s38, %s54
      %p56 = scmp.eq.s32.totalorder %s18, 0
      %p57 = por %p55, %p56
      %s58 = ssub.s32 %s19, %s31
      %p59 = scmp.eq.s32.totalorder %s58, 0
      %s61 = sadd.s32 %s60, 1
      %s62 = scalar_select %p59, %s60, %s61
      %p65 = pneg %p59
      %p66 = scmp.eq.s32.totalorder %s12, 1
      %p67 = por %p65, %p66
      %p68 = scmp.ne.s32.totalorder %s60, %s63
      %p69 = scmp.eq.s32.totalorder %s12, 0
      %p70 = por %p68, %p69
      %p71 = scmp.ne.s32.totalorder %s60, %s63
      %p72 = scmp.eq.s32.totalorder %s17, 1
      %p73 = por %p71, %p72
      %p74 = scmp.ne.s32.totalorder %s63, %s64
      %p75 = scmp.eq.s32.totalorder %s17, 0
      %p76 = por %p74, %p75
      %p77 = scmp.ne.s32.totalorder %s63, %s64
      %p78 = scmp.eq.s32.totalorder %s18, 1
      %p79 = por %p77, %p78
      %p81 = scmp.ne.s32.totalorder %s64, %s80
      %p82 = scmp.eq.s32.totalorder %s18, 0
      %p83 = por %p81, %p82
      %s85 = sadd.s32 %s84, 1
      %p88 = scmp.eq.s32.totalorder %s12, 1
      %p89 = scmp.ne.s32.totalorder %s84, %s86
      %p90 = scmp.eq.s32.totalorder %s12, 0
      %p91 = por %p89, %p90
      %p92 = scmp.ne.s32.totalorder %s84, %s86
      %p93 = scmp.eq.s32.totalorder %s17, 1
      %p94 = por %p92, %p93
      %p95 = scmp.ne.s32.totalorder %s86, %s87
      %p96 = scmp.eq.s32.totalorder %s17, 0
      %p97 = por %p95, %p96
      %p98 = scmp.ne.s32.totalorder %s86, %s87
      %p99 = scmp.eq.s32.totalorder %s18, 1
      %p100 = por %p98, %p99
      %p102 = scmp.ne.s32.totalorder %s87, %s101
      %p103 = scmp.eq.s32.totalorder %s18, 0
      %p104 = por %p102, %p103
      %s105 = ssub.s32 %s19, %s31
      %s106 = ssub.s32 %s20, %s27
      %s107 = sor.u32 %s105, %s106
      %p108 = scmp.eq.s32.totalorder %s107, 0
      %s110 = sadd.s32 %s109, 1
      %s111 = scalar_select %p108, %s109, %s110
      %p114 = pneg %p108
      %p115 = scmp.eq.s32.totalorder %s12, 1
      %p116 = por %p114, %p115
      %p117 = scmp.ne.s32.totalorder %s109, %s112
      %p118 = scmp.eq.s32.totalorder %s12, 0
      %p119 = por %p117, %p118
      %p120 = scmp.ne.s32.totalorder %s109, %s112
      %p121 = scmp.eq.s32.totalorder %s17, 1
      %p122 = por %p120, %p121
      %p123 = scmp.ne.s32.totalorder %s112, %s113
      %p124 = scmp.eq.s32.totalorder %s17, 0
      %p125 = por %p123, %p124
      %p126 = scmp.ne.s32.totalorder %s112, %s113
      %p127 = scmp.eq.s32.totalorder %s18, 1
      %p128 = por %p126, %p127
      %p130 = scmp.ne.s32.totalorder %s113, %s129
      %p131 = scmp.eq.s32.totalorder %s18, 0
      %p132 = por %p130, %p131
      %p133 = scmp.le.s32.totalorder 1, %s12
      %p134 = scmp.lt.s32.totalorder %s12, 3
      %p135 = pnand %p133, %p134
      %p136 = pneg %p135
      // Predicated region
      $region9: #{tpu_custom_call.1} parent=5 // pred_check
        _
      $region10: #{tpu_custom_call.1} parent=5 // pred_check_branch
        %138 = sbr.rel (%p135) target = $region12
      $region11: #{tpu_custom_call.1} parent=5 // pred_region
        %s139 = ssub.s32 %s12, 1
        // Predicated region
        $region13: #{tpu_custom_call.1} parent=11 // pred_check
          %p140 = pneg %p50
        $region14: #{tpu_custom_call.1} parent=11 // pred_check_branch
          %142 = sbr.rel (%p140) target = $region16
        $region15: #{tpu_custom_call.1} parent=11 // pred_region
          %s143 = smul.u32 4, %s22
          %p144 = scmp.lt.s32.totalorder %s143, 3
          %s145 = scalar_select %p144, %s143, 3
          %s146 = smul.addr %s145, 8
          %s147 = scalar_lea.vmem %s0, %s146
          %s148 = smul.u32 4, %s22
        $region16: #{tpu_custom_call.1} parent=11 // pred_fallthru
          _
        // Predicated region
        $region17: #{tpu_custom_call.1} parent=11 // pred_check
          %p149 = pneg %p97
        $region18: #{tpu_custom_call.1} parent=11 // pred_check_branch
          %151 = sbr.rel (%p149) target = $region20
        $region19: #{tpu_custom_call.1} parent=11 // pred_region
          _
        $region20: #{tpu_custom_call.1} parent=11 // pred_fallthru
          _
      $region12: #{tpu_custom_call.1} parent=5 // pred_fallthru
        _
      %p152 = scmp.lt.s32.totalorder %s12, 2
      // Predicated region
      $region21: #{tpu_custom_call.1} parent=5 // pred_check
        %p153 = pneg %p152
      $region22: #{tpu_custom_call.1} parent=5 // pred_check_branch
        %155 = sbr.rel (%p153) target = $region24
      $region23: #{tpu_custom_call.1} parent=5 // pred_region
        // Predicated region
        $region25: #{tpu_custom_call.1} parent=23 // pred_check
          %p156 = pneg %p70
        $region26: #{tpu_custom_call.1} parent=23 // pred_check_branch
          %158 = sbr.rel (%p156) target = $region28
        $region27: #{tpu_custom_call.1} parent=23 // pred_region
          %p159 = scmp.lt.s32.totalorder %s19, 1
          %s160 = scalar_select %p159, %s19, 1
          %s161 = smul.addr %s160, 3
          %s162 = smul.addr %s161, 8
          %s163 = scalar_lea.vmem %s1, %s162
        $region28: #{tpu_custom_call.1} parent=23 // pred_fallthru
          _
      $region24: #{tpu_custom_call.1} parent=5 // pred_fallthru
        _
      %p164 = scmp.le.s32.totalorder 1, %s12
      %p165 = scmp.lt.s32.totalorder %s12, 3
      %p166 = pnand %p164, %p165
      %p167 = pneg %p166
      // Predicated region
      $region29: #{tpu_custom_call.1} parent=5 // pred_check
        _
      $region30: #{tpu_custom_call.1} parent=5 // pred_check_branch
        %169 = sbr.rel (%p166) target = $region32
      $region31: #{tpu_custom_call.1} parent=5 // pred_region
        %s170 = ssub.s32 %s12, 1
        %s171 = smul.u32 4, %s22
        %p172 = scmp.lt.s32.totalorder %s171, 3
        %s173 = scalar_select %p172, %s171, 3
        %s174 = smul.addr %s173, 8
        %s175 = scalar_lea.vmem %s0, %s174
        %p176 = pneg %p50
        %p177 = pneg %p47
        %p178 = scmp.lt.s32.totalorder %s21, 1
        %s179 = scalar_select %p178, %s21, 1
        %s180 = smul.addr %s179, 3
        %s181 = smul.addr %s180, 8
        %s182 = scalar_lea.vmem %s1, %s181
        %p183 = pneg %p76
        %p184 = pneg %p73
        %p185 = pneg %p97
        %p186 = pneg %p94
        %p187 = pneg %p125
        %p188 = pneg %p122
        %s189 = sand.u32 %s112, 1
        %s190 = scalar_lea.sflag [#allocation3], %s189
        %s191 = sand.u32 %s112, 1
        %s192 = smul.addr %s191, 32
        %s193 = scalar_lea.vmem [#allocation2], %s192
        %s194 = smul.u32 4, %s22
        %p195 = scmp.lt.s32.totalorder %s194, 3
        %s196 = scalar_select %p195, %s194, 3
        %s197 = smul.addr %s196, 8
        %s198 = scalar_lea.vmem %s0, %s197
        %s199 = smul.u32 4, %s22
        %p200 = scmp.lt.s32.totalorder %s21, 1
        %s201 = scalar_select %p200, %s21, 1
        %s202 = smul.addr %s201, 3
        %s203 = smul.addr %s202, 8
        %s204 = scalar_lea.vmem %s1, %s203
        %s205 = smul.u32 4, %s22
        %v206 = vld [vmem:[%s198] sm:$0xff]
        %v207 = vld [vmem:[%s198 + $0x8] sm:$0xff]
        %v208 = vld [vmem:[%s198 + $0x10] sm:$0xff]
        %v209 = vld [vmem:[%s198 + $0x18] sm:$0xff]
        %v210 = vld [vmem:[%s204] sm:$0xff]
        %v211 = vld [vmem:[%s204 + $0x8] sm:$0xff]
        %v212 = vld [vmem:[%s204 + $0x10] sm:$0x3]
        %vm213 = vcmask 146432
        %v215 = vsel %vm213, %v206, 0
        %v218 = vsel %vm213, %v207, 0
        %v221 = vsel %vm213, %v208, 0
        %v224 = vsel %vm213, %v209, 0
        %vm226 = vcmask 1041408
        %v228 = vsel %vm226, %v212, 0
        %230 = vmatprep.subr.mxu0 0.0
        %231 = vmatpush1.msra.mxu0 0.0
        %232 = vmatprep.subr.mxu0 0.0
        %233 = vmatpush1.msra.mxu0 0.0
        %234 = vmatprep.subr.mxu0 0.0
        %235 = vmatpush1.msra.mxu0 0.0
        %236 = vmatprep.subr.mxu0 0.0
        %237 = vmatpush1.msra.mxu0 0.0
        %238 = vmatprep.subr.mxu0 0.0
        %239 = vmatpush1.msra.mxu0 0.0
        %240 = vmatprep.subr.mxu0 0.0
        %241 = vmatpush1.msra.mxu0 0.0
        %242 = vmatprep.subr.mxu0 0.0
        %243 = vmatpush1.msra.mxu0 0.0
        %244 = vmatprep.subr.mxu0 0.0
        %245 = vmatpush1.msra.mxu0 0.0
        %246 = vmatprep.subr.mxu0 0.0
        %247 = vmatpush1.msra.mxu0 0.0
        %248 = vmatprep.subr.mxu0 0.0
        %249 = vmatpush1.msra.mxu0 0.0
        %250 = vmatprep.subr.mxu0 0.0
        %251 = vmatpush1.msra.mxu0 0.0
        %252 = vmatprep.subr.mxu0 0.0
        %253 = vmatpush1.msra.mxu0 0.0
        %254 = vmatprep.subr.mxu0 0.0
        %255 = vmatpush1.msra.mxu0 0.0
        %256 = vmatprep.subr.mxu0 0.0
        %257 = vmatpush1.msra.mxu0 %v228
        %258 = vmatprep.subr.mxu0 0.0
        %259 = vmatpush1.msra.mxu0 %v211
        %260 = vmatprep.subr.mxu0 0.0
        %261 = vmatpush1.msra.mxu0 %v210
        %262 = vmatprep.subr.mxu0 0.0
        %263 = vmatpush2.msra.mxu0 0.0
        %264 = vmatprep.subr.mxu0 0.0
        %265 = vmatpush2.msra.mxu0 0.0
        %266 = vmatprep.subr.mxu0 0.0
        %267 = vmatpush2.msra.mxu0 0.0
        %268 = vmatprep.subr.mxu0 0.0
        %269 = vmatpush2.msra.mxu0 0.0
        %270 = vmatprep.subr.mxu0 0.0
        %271 = vmatpush2.msra.mxu0 0.0
        %272 = vmatprep.subr.mxu0 0.0
        %273 = vmatpush2.msra.mxu0 0.0
        %274 = vmatprep.subr.mxu0 0.0
        %275 = vmatpush2.msra.mxu0 0.0
        %276 = vmatprep.subr.mxu0 0.0
        %277 = vmatpush2.msra.mxu0 0.0
        %278 = vmatprep.subr.mxu0 0.0
        %279 = vmatpush2.msra.mxu0 0.0
        %280 = vmatprep.subr.mxu0 0.0
        %281 = vmatpush2.msra.mxu0 0.0
        %282 = vmatprep.subr.mxu0 0.0
        %283 = vmatpush2.msra.mxu0 0.0
        %284 = vmatprep.subr.mxu0 0.0
        %285 = vmatpush2.msra.mxu0 0.0
        %286 = vmatprep.subr.mxu0 0.0
        %287 = vmatpush2.msra.mxu0 0.0
        %288 = vmatprep.subr.mxu0 0.0
        %289 = vmatpush2.msra.mxu0 0.0
        %290 = vmatprep.subr.mxu0 0.0
        %291 = vmatpush2.msra.mxu0 0.0
        %292 = vmatprep.subr.mxu0 0.0
        %293 = vmatpush2.msra.mxu0 0.0
        %294 = vmatprep.mubr.f32.mxu0 0.0
        %295 = vmatmul.mubr.f32.gmra.mxu0 %v215
        %v296 = vpop.f32.mrf.mxu0
        %v297 = vadd.f32 0.0, %v296
        %v298 = vpop.f32.mrf.mxu0
        %299 = vmatprep.mubr.f32.mxu0 0.0
        %300 = vmatmul.mubr.f32.gmra.mxu0 %v218
        %v301 = vpop.f32.mrf.mxu0
        %v302 = vadd.f32 0.0, %v301
        %v303 = vpop.f32.mrf.mxu0
        %304 = vmatprep.mubr.f32.mxu0 0.0
        %305 = vmatmul.mubr.f32.gmra.mxu0 %v221
        %v306 = vpop.f32.mrf.mxu0
        %v307 = vadd.f32 0.0, %v306
        %v308 = vpop.f32.mrf.mxu0
        %309 = vmatprep.mubr.f32.mxu0 0.0
        %310 = vmatmul.mubr.f32.gmra.mxu0 %v224
        %v311 = vpop.f32.mrf.mxu0
        %v312 = vadd.f32 0.0, %v311
        %v313 = vpop.f32.mrf.mxu0
        %314 = vdwg.mxu0
        %v315 = vld [vmem:[%s2] sm:$0xff]
        %v316 = vld [vmem:[%s2 + $0x8] sm:$0xff]
        %v317 = vld [vmem:[%s2 + $0x10] sm:$0xff]
        %v318 = vld [vmem:[%s2 + $0x18] sm:$0xff]
        %v319 = vld [vmem:[%s2 + $0x20] sm:$0xff]
        %v320 = vld [vmem:[%s2 + $0x28] sm:$0xff]
        %v321 = vld [vmem:[%s2 + $0x30] sm:$0xff]
        %v322 = vld [vmem:[%s2 + $0x38] sm:$0xff]
        %v323 = vld [vmem:[%s2 + $0x40] sm:$0xff]
        %vm324 = vcmask 588800
        %v326 = vsel %vm324, %v297, 0
        %v329 = vsel %vm324, %v302, 0
        %v332 = vsel %vm324, %v307, 0
        %v335 = vsel %vm324, %v312, 0
        %337 = vmatprep.subr.mxu0 0.0
        %338 = vmatpush1.msra.mxu0 0.0
        %339 = vmatprep.subr.mxu0 0.0
        %340 = vmatpush1.msra.mxu0 0.0
        %341 = vmatprep.subr.mxu0 0.0
        %342 = vmatpush1.msra.mxu0 0.0
        %343 = vmatprep.subr.mxu0 0.0
        %344 = vmatpush1.msra.mxu0 0.0
        %345 = vmatprep.subr.mxu0 0.0
        %346 = vmatpush1.msra.mxu0 0.0
        %347 = vmatprep.subr.mxu0 0.0
        %348 = vmatpush1.msra.mxu0 0.0
        %349 = vmatprep.subr.mxu0 0.0
        %350 = vmatpush1.msra.mxu0 0.0
        %351 = vmatprep.subr.mxu0 0.0
        %352 = vmatpush1.msra.mxu0 %v323
        %353 = vmatprep.subr.mxu0 0.0
        %354 = vmatpush1.msra.mxu0 %v322
        %355 = vmatprep.subr.mxu0 0.0
        %356 = vmatpush1.msra.mxu0 %v321
        %357 = vmatprep.subr.mxu0 0.0
        %358 = vmatpush1.msra.mxu0 %v320
        %359 = vmatprep.subr.mxu0 0.0
        %360 = vmatpush1.msra.mxu0 %v319
        %361 = vmatprep.subr.mxu0 0.0
        %362 = vmatpush1.msra.mxu0 %v318
        %363 = vmatprep.subr.mxu0 0.0
        %364 = vmatpush1.msra.mxu0 %v317
        %365 = vmatprep.subr.mxu0 0.0
        %366 = vmatpush1.msra.mxu0 %v316
        %367 = vmatprep.subr.mxu0 0.0
        %368 = vmatpush1.msra.mxu0 %v315
        %369 = vmatprep.subr.mxu0 0.0
        %370 = vmatpush2.msra.mxu0 0.0
        %371 = vmatprep.subr.mxu0 0.0
        %372 = vmatpush2.msra.mxu0 0.0
        %373 = vmatprep.subr.mxu0 0.0
        %374 = vmatpush2.msra.mxu0 0.0
        %375 = vmatprep.subr.mxu0 0.0
        %376 = vmatpush2.msra.mxu0 0.0
        %377 = vmatprep.subr.mxu0 0.0
        %378 = vmatpush2.msra.mxu0 0.0
        %379 = vmatprep.subr.mxu0 0.0
        %380 = vmatpush2.msra.mxu0 0.0
        %381 = vmatprep.subr.mxu0 0.0
        %382 = vmatpush2.msra.mxu0 0.0
        %383 = vmatprep.subr.mxu0 0.0
        %384 = vmatpush2.msra.mxu0 0.0
        %385 = vmatprep.subr.mxu0 0.0
        %386 = vmatpush2.msra.mxu0 0.0
        %387 = vmatprep.subr.mxu0 0.0
        %388 = vmatpush2.msra.mxu0 0.0
        %389 = vmatprep.subr.mxu0 0.0
        %390 = vmatpush2.msra.mxu0 0.0
        %391 = vmatprep.subr.mxu0 0.0
        %392 = vmatpush2.msra.mxu0 0.0
        %393 = vmatprep.subr.mxu0 0.0
        %394 = vmatpush2.msra.mxu0 0.0
        %395 = vmatprep.subr.mxu0 0.0
        %396 = vmatpush2.msra.mxu0 0.0
        %397 = vmatprep.subr.mxu0 0.0
        %398 = vmatpush2.msra.mxu0 0.0
        %399 = vmatprep.subr.mxu0 0.0
        %400 = vmatpush2.msra.mxu0 0.0
        %401 = vmatprep.mubr.f32.mxu0 0.0
        %402 = vmatmul.mubr.f32.gmra.mxu0 %v326
        %v403 = vpop.f32.mrf.mxu0
        %v404 = vadd.f32 0.0, %v403
        %v405 = vpop.f32.mrf.mxu0
        %406 = vmatprep.mubr.f32.mxu0 0.0
        %407 = vmatmul.mubr.f32.gmra.mxu0 %v329
        %v408 = vpop.f32.mrf.mxu0
        %v409 = vadd.f32 0.0, %v408
        %v410 = vpop.f32.mrf.mxu0
        %411 = vmatprep.mubr.f32.mxu0 0.0
        %412 = vmatmul.mubr.f32.gmra.mxu0 %v332
        %v413 = vpop.f32.mrf.mxu0
        %v414 = vadd.f32 0.0, %v413
        %v415 = vpop.f32.mrf.mxu0
        %416 = vmatprep.mubr.f32.mxu0 0.0
        %417 = vmatmul.mubr.f32.gmra.mxu0 %v335
        %v418 = vpop.f32.mrf.mxu0
        %v419 = vadd.f32 0.0, %v418
        %v420 = vpop.f32.mrf.mxu0
        %421 = vdwg.mxu0
        %422 = vst [vmem:[%s193] sm:$0xff] %v404
        %423 = vst [vmem:[%s193 + $0x8] sm:$0xff] %v409
        %424 = vst [vmem:[%s193 + $0x10] sm:$0xff] %v414
        %425 = vst [vmem:[%s193 + $0x18] sm:$0xff] %v419
        %s426 = sand.u32 %s112, 1
        %s427 = scalar_lea.sflag [#allocation3], %s426
        %s428 = sand.u32 %s112, 1
        %s429 = smul.addr %s428, 32
        %s430 = scalar_lea.vmem [#allocation2], %s429
        // Predicated region
        $region33: #{tpu_custom_call.1} parent=31 // pred_check
          %p431 = pneg %p122
        $region34: #{tpu_custom_call.1} parent=31 // pred_check_branch
          %433 = sbr.rel (%p431) target = $region36
        $region35: #{tpu_custom_call.1} parent=31 // pred_region
          %s434 = smul.u32 4, %s22
          %s436 = ssub.s32 512, 512
          %437 = vsyncadd %s427, %s436
          %s438 = smul.addr %s21, 4
          %s439 = sadd.s32 %s434, %s438
          %s440 = smul.addr %s439, 128
          %s441 = scalar_lea.hbm %s3, %s440
          %s442 = sshll.u32 %s430, 4
          %s443 = int_to_ptr.vmem [resolvable:$true] %s442
          %448 = dma.vmem_to_hbm [thread:$0]  %s443, 512, %s441, %s427, 128, 128, 8
        $region36: #{tpu_custom_call.1} parent=31 // pred_fallthru
          _
      $region32: #{tpu_custom_call.1} parent=5 // pred_fallthru
        _
      %p449 = scmp.le.s32.totalorder 2, %s12
      // Predicated region
      $region37: #{tpu_custom_call.1} parent=5 // pred_check
        %p450 = pneg %p449
      $region38: #{tpu_custom_call.1} parent=5 // pred_check_branch
        %452 = sbr.rel (%p450) target = $region40
      $region39: #{tpu_custom_call.1} parent=5 // pred_region
        %s453 = ssub.s32 %s12, 2
        // Predicated region
        $region41: #{tpu_custom_call.1} parent=39 // pred_check
          %p454 = pneg %p128
        $region42: #{tpu_custom_call.1} parent=39 // pred_check_branch
          %456 = sbr.rel (%p454) target = $region44
        $region43: #{tpu_custom_call.1} parent=39 // pred_region
          %s457 = sand.u32 %s113, 1
          %s458 = scalar_lea.sflag [#allocation3], %s457
          %s459 = sand.u32 %s113, 1
          %s460 = smul.addr %s459, 32
          %s461 = scalar_lea.vmem [#allocation2], %s460
          %462 = dma.done %s458, 512
        $region44: #{tpu_custom_call.1} parent=39 // pred_fallthru
          _
      $region40: #{tpu_custom_call.1} parent=5 // pred_fallthru
        _
    $region6: #{tpu_custom_call.1} parent=1 // loop_footer
      %s16 = sadd.s32 1, %s12
    $region7: #{tpu_custom_call.1} parent=1 // loop_footer_branch
      %11 = sbr.rel target = $region3
    $region8: #{tpu_custom_call.1} parent=1 // loop_exit
      _
    %463 = vsyncpa [#allocation3], 1
    %s464 = scalar_lea.sflag [#allocation3], 1
    %465 = vsyncpa %s464, 1

</llo_original>
